<compile_context>
chip_gen: v7x
topology: tpu7x:2x2x1
jax: 0.10.0
libtpu: 0.0.40
codegen_flags: <defaults>
</compile_context>

<pallas_src>
import functools

import jax
import jax.numpy as jnp
from jax.experimental import pallas as pl
from jax.experimental.pallas import tpu as pltpu


def linear_kernel(x_ref, w_ref, b_ref, o_ref):
    # x_ref: (TM, K) f32, w_ref: (K, N) f32, b_ref: (1, N) f32, o_ref: (TM, N).
    # y = x @ W^T + b : MXU matmul with f32 accumulation, bias broadcast on VPU.
    o_ref[...] = (
        jnp.dot(x_ref[...], w_ref[...], preferred_element_type=jnp.float32)
        + b_ref[...]
    )


def _round_up(x, m):
    return ((x + m - 1) // m) * m


@functools.partial(jax.jit, static_argnames=("tm",))
def encoder_forward(x, w_t, b, *, tm=2048):
    """x: (M, K), w_t: (K, N), b: (N,) -> (M, N).  Matches torch y = x @ W.T + b."""
    M, K = x.shape
    N = w_t.shape[1]
    b2 = b.reshape(1, N)

    # Row tile: whole (8-rounded) batch when small; otherwise cap at `tm` while
    # keeping the grid at >= 2 steps so v7x's two TensorCores both participate.
    m8 = max(8, _round_up(M, 8))
    if m8 <= 512:
        tm_eff = m8
    else:
        tm_eff = min(tm, _round_up((m8 + 1) // 2, 8))

    grid_m = pl.cdiv(M, tm_eff)

    out = pl.pallas_call(
        linear_kernel,
        out_shape=jax.ShapeDtypeStruct((M, N), jnp.float32),
        grid=(grid_m,),
        in_specs=[
            pl.BlockSpec((tm_eff, K), lambda i: (i, 0)),  # stream x row tiles
            pl.BlockSpec((K, N), lambda i: (0, 0)),       # weight resident in VMEM
            pl.BlockSpec((1, N), lambda i: (0, 0)),       # bias resident in VMEM
        ],
        out_specs=pl.BlockSpec((tm_eff, N), lambda i: (i, 0)),
        compiler_params=pltpu.CompilerParams(
            dimension_semantics=("parallel",),
        ),
        cost_estimate=pl.CostEstimate(
            flops=2 * M * K * N,
            transcendentals=0,
            bytes_accessed=4 * (M * K + K * N + N + M * N),
        ),
    )(x, w_t, b2)

    return out


if __name__ == "__main__":
    # Shapes consistent with the module: num_g = 32, hid unused, out = 200.
    num_g, out_features = 32, 200

    key = jax.random.PRNGKey(0)
    kx, kw, kb, kx2 = jax.random.split(key, 4)

    # Deterministic parameter init (PyTorch Linear-style uniform bound).
    bound = 1.0 / jnp.sqrt(jnp.float32(num_g))
    W = jax.random.uniform(kw, (out_features, num_g), jnp.float32, -bound, bound)
    b = jax.random.uniform(kb, (out_features,), jnp.float32, -bound, bound)

    # Small-batch path: single grid step, whole batch in one tile.
    batch = 8
    x = jax.random.normal(kx, (batch, num_g), jnp.float32)
    y = encoder_forward(x, W.T, b)
    jax.block_until_ready(y)
    y_ref = x @ W.T + b
    assert y.shape == (batch, out_features)
    assert jnp.allclose(y, y_ref, atol=1e-5, rtol=1e-5)

    # Larger batch exercises the 2-step parallel grid and the ragged last
    # block (masked output stores; no M/N padding anywhere).
    batch2 = 1000
    x2 = jax.random.normal(kx2, (batch2, num_g), jnp.float32)
    y2 = encoder_forward(x2, W.T, b)
    jax.block_until_ready(y2)
    y2_ref = x2 @ W.T + b
    assert y2.shape == (batch2, out_features)
    assert jnp.allclose(y2, y2_ref, atol=1e-5, rtol=1e-5)

    print("KERNEL_OK")
</pallas_src>

<mosaic_0001>
module attributes {stable_mosaic.version = 11 : i64} {
  func.func @linear_kernel(%arg0: i32, %arg1: memref<8x32xf32, #tpu.memory_space<vmem>>, %arg2: memref<32x200xf32, #tpu.memory_space<vmem>>, %arg3: memref<1x200xf32, #tpu.memory_space<vmem>>, %arg4: memref<8x200xf32, #tpu.memory_space<vmem>>) attributes {dimension_semantics = [#tpu.dimension_semantics<parallel>], iteration_bounds = array<i64: 1>, scalar_prefetch = 0 : i64, scratch_operands = 0 : i64, tpu.core_type = #tpu.core_type<tc>, window_params = [{transform_indices = @transform_0, window_bounds = array<i64: 8, 32>}, {pipeline_mode = #tpu.pipeline_mode<synchronous>, transform_indices = @transform_1, window_bounds = array<i64: 32, 200>}, {pipeline_mode = #tpu.pipeline_mode<synchronous>, transform_indices = @transform_2, window_bounds = array<i64: 1, 200>}, {transform_indices = @transform_3, window_bounds = array<i64: 8, 200>}]} {
    %c0 = arith.constant 0 : index
    %c0_0 = arith.constant 0 : index
    %0 = vector.load %arg1[%c0, %c0_0] : memref<8x32xf32, #tpu.memory_space<vmem>>, vector<8x32xf32>
    %c0_1 = arith.constant 0 : index
    %c0_2 = arith.constant 0 : index
    %1 = vector.load %arg2[%c0_1, %c0_2] : memref<32x200xf32, #tpu.memory_space<vmem>>, vector<32x200xf32>
    %cst = arith.constant dense<0.000000e+00> : vector<8x200xf32>
    %2 = tpu.matmul %0, %1, %cst {dimension_numbers = #tpu.dot_dimension_numbers<[1], [0], [0], [1], [0, 0, 1, 1], [], []>} : vector<8x32xf32>, vector<32x200xf32>, vector<8x200xf32> -> vector<8x200xf32>
    %c0_3 = arith.constant 0 : index
    %c0_4 = arith.constant 0 : index
    %3 = vector.load %arg3[%c0_3, %c0_4] : memref<1x200xf32, #tpu.memory_space<vmem>>, vector<1x200xf32>
    %4 = vector.broadcast %3 : vector<1x200xf32> to vector<8x200xf32>
    %5 = arith.addf %2, %4 : vector<8x200xf32>
    %c0_5 = arith.constant 0 : index
    %c0_6 = arith.constant 0 : index
    %6 = vector.load %arg4[%c0_5, %c0_6] : memref<8x200xf32, #tpu.memory_space<vmem>>, vector<8x200xf32>
    tpu.vector_store %arg4[%c0_5, %c0_6], %5 {strides = array<i32>} : memref<8x200xf32, #tpu.memory_space<vmem>>, vector<8x200xf32>,
    return
  }
  func.func @transform_0(%arg0: i32) -> (i32, i32) {
    %c0_i32 = arith.constant 0 : i32
    %c0_i32_0 = arith.constant 0 : i32
    return %arg0, %c0_i32 : i32, i32
  }
  func.func @transform_1(%arg0: i32) -> (i32, i32) {
    %c0_i32 = arith.constant 0 : i32
    %c0_i32_0 = arith.constant 0 : i32
    %c0_i32_1 = arith.constant 0 : i32
    return %c0_i32, %c0_i32_0 : i32, i32
  }
  func.func @transform_2(%arg0: i32) -> (i32, i32) {
    %c0_i32 = arith.constant 0 : i32
    %c0_i32_0 = arith.constant 0 : i32
    %c0_i32_1 = arith.constant 0 : i32
    return %c0_i32, %c0_i32_0 : i32, i32
  }
  func.func @transform_3(%arg0: i32) -> (i32, i32) {
    %c0_i32 = arith.constant 0 : i32
    %c0_i32_0 = arith.constant 0 : i32
    return %arg0, %c0_i32 : i32, i32
  }
}

</mosaic_0001>

<llo_original>
// kernel: encoder_forward.1
$region0: #{encoder_forward.1}
  #allocation0 [shape = 'u32[]', space=smem, size = 0x4, offset = 0x4, fixed_abs, tag = 'smem constant byte address 0x4 - core index']
  #allocation1 [shape = 'u32[144,128]{1,0:T(1,128)}', space=vmem, size = 0x12000, scoped, tag = 'internal scratch']
  %s0 = inlined_call_operand.hbm [shape: f32[8,32], index: 0, kind: input, shape index: {}]
  %s1 = inlined_call_operand.hbm [shape: f32[32,200], index: 1, kind: input, shape index: {}]
  %s2 = inlined_call_operand.vmem [shape: f32[1,200], index: 2, kind: input, shape index: {}]
  %s3 = inlined_call_operand.hbm [shape: f32[8,200], index: 3, kind: output, shape index: {}]
  %s4 = sld [smem:[#allocation0]]
  $region30: #{encoder_forward.1} parent=0
    _
  %s6 = ssub.s32 1, %s4
  %s7 = scalar_select 0, %s6, %s4
  $region1: #{encoder_forward.1} parent=0
    #allocation2 [shape = 'u8[4096]{0}', space=vmem, size = 0x1000, scoped, tag = 'input window, operand 0, single buffered']
    #allocation3 [shape = 's32[1]{0}', space=sflag, size = 0x4, scoped, tag = 'scoped memory for encoder_forward.1']
    #allocation4 [shape = 's32[1]{0}', space=sflag, size = 0x4, scoped, tag = 'scoped memory for encoder_forward.1']
    #allocation5 [shape = 'u8[32768]{0}', space=vmem, size = 0x8000, scoped, tag = 'input window, operand 1, single buffered']
    #allocation6 [shape = 's32[1]{0}', space=sflag, size = 0x4, scoped, tag = 'scoped memory for encoder_forward.1']
    #allocation7 [shape = 'u8[8192]{0}', space=vmem, size = 0x2000, scoped, tag = 'output window, operand 0, single buffered']
    %8 = vsyncpa [#allocation3], 0
    %9 = vsyncpa [#allocation6], 0
    %10 = vsyncpa [#allocation4], 0
    // Predicated region
    $region2: #{encoder_forward.1} parent=1 // pred_check
      _
    $region3: #{encoder_forward.1} parent=1 // pred_check_branch
      %12 = sbr.rel (0) target = $region5
    $region4: #{encoder_forward.1} parent=1 // pred_region
      %s14 = ssub.s32 128, 128
      %15 = vsyncadd [#allocation3], %s14
      %s17 = sshll.u32 [#allocation2], 4
      %s18 = int_to_ptr.vmem [resolvable:$true] %s17
      %20 = dma.hbm_to_vmem [thread:$0]  %s0, 128, %s18, [#allocation3]
    $region5: #{encoder_forward.1} parent=1 // pred_fallthru
      _
    // Predicated region
    $region6: #{encoder_forward.1} parent=1 // pred_check
      _
    $region7: #{encoder_forward.1} parent=1 // pred_check_branch
      %22 = sbr.rel (0) target = $region9
    $region8: #{encoder_forward.1} parent=1 // pred_region
      %s24 = ssub.s32 1024, 1024
      %25 = vsyncadd [#allocation6], %s24
      %s26 = sshll.u32 [#allocation5], 4
      %s27 = int_to_ptr.vmem [resolvable:$true] %s26
      %32 = dma.hbm_to_vmem [thread:$0]  %s1, 1024, %s27, [#allocation6], 256, 256, 16
    $region9: #{encoder_forward.1} parent=1 // pred_fallthru
      _
    // Predicated region
    $region10: #{encoder_forward.1} parent=1 // pred_check
      _
    $region11: #{encoder_forward.1} parent=1 // pred_check_branch
      %34 = sbr.rel (0) target = $region13
    $region12: #{encoder_forward.1} parent=1 // pred_region
      _
    $region13: #{encoder_forward.1} parent=1 // pred_fallthru
      _
    // Predicated region
    $region14: #{encoder_forward.1} parent=1 // pred_check
      _
    $region15: #{encoder_forward.1} parent=1 // pred_check_branch
      %36 = sbr.rel (0) target = $region17
    $region16: #{encoder_forward.1} parent=1 // pred_region
      %37 = dma.done [#allocation3], 128
    $region17: #{encoder_forward.1} parent=1 // pred_fallthru
      _
    // Predicated region
    $region18: #{encoder_forward.1} parent=1 // pred_check
      _
    $region19: #{encoder_forward.1} parent=1 // pred_check_branch
      %39 = sbr.rel (0) target = $region21
    $region20: #{encoder_forward.1} parent=1 // pred_region
      %40 = dma.done [#allocation6], 1024
    $region21: #{encoder_forward.1} parent=1 // pred_fallthru
      _
    %v41 = vld [vmem:[#allocation2] sm:$0xff]
    %v42 = vld [vmem:[#allocation5] sm:$0xff]
    %v43 = vld [vmem:[#allocation5 + $0x8] sm:$0xff]
    %v44 = vld [vmem:[#allocation5 + $0x10] sm:$0xff]
    %v45 = vld [vmem:[#allocation5 + $0x18] sm:$0xff]
    %v46 = vld [vmem:[#allocation5 + $0x20] sm:$0xff]
    %v47 = vld [vmem:[#allocation5 + $0x28] sm:$0xff]
    %v48 = vld [vmem:[#allocation5 + $0x30] sm:$0xff]
    %v49 = vld [vmem:[#allocation5 + $0x38] sm:$0xff]
    %v50 = vld [vmem:[%s2] sm:$0x3]
    %v52 = vlaneseq
    %v53 = vshrl.u32 %v52, 7
    %v54 = vsub.s32 0, %v53
    %v55 = vrot.slane %v50, %v54
    %v56 = vlaneseq
    %v57 = vshrl.u32 %v56, 7
    %v58 = vsub.s32 1, %v57
    %v59 = vrot.slane %v50, %v58
    %vm62 = vcmask 261120
    %v64 = vsel %vm62, %v41, 0
    %66 = vmatprep.subr.mxu0 %v43
    %67 = vmatpush1.msra.mxu0 %v42
    %68 = vmatprep.subr.mxu0 %v45
    %69 = vmatpush1.msra.mxu0 %v44
    %70 = vmatprep.subr.mxu0 %v47
    %71 = vmatpush1.msra.mxu0 %v46
    %72 = vmatprep.subr.mxu0 %v49
    %73 = vmatpush1.msra.mxu0 %v48
    %74 = vmatprep.subr.mxu0 0.0
    %75 = vmatpush1.msra.mxu0 0.0
    %76 = vmatprep.subr.mxu0 0.0
    %77 = vmatpush1.msra.mxu0 0.0
    %78 = vmatprep.subr.mxu0 0.0
    %79 = vmatpush1.msra.mxu0 0.0
    %80 = vmatprep.subr.mxu0 0.0
    %81 = vmatpush1.msra.mxu0 0.0
    %82 = vmatprep.subr.mxu0 0.0
    %83 = vmatpush1.msra.mxu0 0.0
    %84 = vmatprep.subr.mxu0 0.0
    %85 = vmatpush1.msra.mxu0 0.0
    %86 = vmatprep.subr.mxu0 0.0
    %87 = vmatpush1.msra.mxu0 0.0
    %88 = vmatprep.subr.mxu0 0.0
    %89 = vmatpush1.msra.mxu0 0.0
    %90 = vmatprep.subr.mxu0 0.0
    %91 = vmatpush1.msra.mxu0 0.0
    %92 = vmatprep.subr.mxu0 0.0
    %93 = vmatpush1.msra.mxu0 0.0
    %94 = vmatprep.subr.mxu0 0.0
    %95 = vmatpush1.msra.mxu0 0.0
    %96 = vmatprep.subr.mxu0 0.0
    %97 = vmatpush1.msra.mxu0 0.0
    %98 = vmatprep.subr.mxu0 0.0
    %99 = vmatpush1.msra.mxu0 0.0
    %100 = vmatprep.subr.mxu0 0.0
    %101 = vmatpush1.msra.mxu0 0.0
    %102 = vmatprep.subr.mxu0 0.0
    %103 = vmatpush1.msra.mxu0 0.0
    %104 = vmatprep.subr.mxu0 0.0
    %105 = vmatpush1.msra.mxu0 0.0
    %106 = vmatprep.subr.mxu0 0.0
    %107 = vmatpush1.msra.mxu0 0.0
    %108 = vmatprep.subr.mxu0 0.0
    %109 = vmatpush1.msra.mxu0 0.0
    %110 = vmatprep.subr.mxu0 0.0
    %111 = vmatpush1.msra.mxu0 0.0
    %112 = vmatprep.subr.mxu0 0.0
    %113 = vmatpush1.msra.mxu0 0.0
    %114 = vmatprep.subr.mxu0 0.0
    %115 = vmatpush1.msra.mxu0 0.0
    %116 = vmatprep.subr.mxu0 0.0
    %117 = vmatpush1.msra.mxu0 0.0
    %118 = vmatprep.subr.mxu0 0.0
    %119 = vmatpush1.msra.mxu0 0.0
    %120 = vmatprep.subr.mxu0 0.0
    %121 = vmatpush1.msra.mxu0 0.0
    %122 = vmatprep.subr.mxu0 0.0
    %123 = vmatpush1.msra.mxu0 0.0
    %124 = vmatprep.subr.mxu0 0.0
    %125 = vmatpush1.msra.mxu0 0.0
    %126 = vmatprep.subr.mxu0 0.0
    %127 = vmatpush1.msra.mxu0 0.0
    %128 = vmatprep.subr.mxu0 0.0
    %129 = vmatpush1.msra.mxu0 0.0
    %130 = vmatprep.mubr.f32.mxu0 0.0
    %131 = vmatmul.mubr.f32.gmra.mrb[0].mxu0 %v64
    %v132 = vpop.f32.mrb[0].mxu0
    %v133 = vadd.f32 %v55, %v132
    %v134 = vpop.f32.mrb[0].mxu0
    %v135 = vadd.f32 %v59, %v134
    %136 = vdwg.mxu0
    %137 = vst [vmem:[#allocation7] sm:$0xff] %v133
    %vm138 = vcmask 588800
    %139 = vst.msk [vmem:[#allocation7 + $0x8] sm:$0xff] %vm138, %v135
    // Predicated region
    $region22: #{encoder_forward.1} parent=1 // pred_check
      _
    $region23: #{encoder_forward.1} parent=1 // pred_check_branch
      %141 = sbr.rel (0) target = $region25
    $region24: #{encoder_forward.1} parent=1 // pred_region
      %s143 = ssub.s32 256, 256
      %144 = vsyncadd [#allocation4], %s143
      %s146 = sshll.u32 [#allocation7], 4
      %s147 = int_to_ptr.vmem [resolvable:$true] %s146
      %149 = dma.vmem_to_hbm [thread:$0]  %s147, 256, %s3, [#allocation4]
    $region25: #{encoder_forward.1} parent=1 // pred_fallthru
      _
    // Predicated region
    $region26: #{encoder_forward.1} parent=1 // pred_check
      _
    $region27: #{encoder_forward.1} parent=1 // pred_check_branch
      %151 = sbr.rel (0) target = $region29
    $region28: #{encoder_forward.1} parent=1 // pred_region
      %152 = dma.done [#allocation4], 256
    $region29: #{encoder_forward.1} parent=1 // pred_fallthru
      _
    %153 = vsyncpa [#allocation3], 1
    %154 = vsyncpa [#allocation6], 1
    %155 = vsyncpa [#allocation4], 1

</llo_original>
